<compile_context>
chip_gen: v7x
topology: tpu7x:2x2x1
jax: 0.10.0
libtpu: 0.0.40
codegen_flags: <defaults>
</compile_context>

<pallas_src>
import functools

import jax
import jax.numpy as jnp
from jax.experimental import pallas as pl
from jax.experimental.pallas import tpu as pltpu


def _round_up(x, m):
    return ((x + m - 1) // m) * m


def _pad2(a, rows, cols):
    r, c = a.shape
    if (r, c) == (rows, cols):
        return a
    return jnp.pad(a, ((0, rows - r), (0, cols - c)))


def _tensorcores_per_chip():
    """Best-effort TensorCore count per chip (megacore parts report 2)."""
    try:
        kind = jax.devices()[0].device_kind.lower()
    except Exception:
        return 1
    return 2 if any(tag in kind for tag in ("v7", "v5p", "v4")) else 1


def _pick_block_b(B, cap=512):
    """Batch tile: multiple of 8, <= cap.

    Single-TC parts (v5e/v6e): take the largest tile -- the grid is a serial
    loop and the tiny compute already hides under the dominant x DMA, so a
    forced split only adds per-step overhead.
    Dual-TC parts (v7x): aim for >= 4 grid steps with an even count so each
    core gets >= 2 steps (intra-core DMA/compute overlap) and neither idles.
    """
    block = min(_round_up(B, 8), cap)
    if _tensorcores_per_chip() >= 2 and B >= 64:
        block = min(block, _round_up(pl.cdiv(B, 4), 8))
        steps = pl.cdiv(B, block)
        if steps % 2:  # keep the step count even
            block = _round_up(pl.cdiv(B, steps + 1), 8)
    return max(block, 8)


def _concat_head_kernel(x1_ref, x2_ref, w1_ref, b1_ref, w2_ref, b2_ref, o_ref):
    half = w1_ref.shape[0] // 2
    # fc1 over the *virtual* concat: h = [x1 | x2] @ [W1_top; W1_bot] + b1.
    # W1 is resident; the two halves are zero-cost static ref slices.
    h = jnp.dot(x1_ref[...], w1_ref[pl.ds(0, half), :],
                preferred_element_type=jnp.float32)
    h = h + jnp.dot(x2_ref[...], w1_ref[pl.ds(half, half), :],
                    preferred_element_type=jnp.float32)
    # bias + ReLU in f32 (VPU slack is free under the HBM-bound roofline).
    h = jnp.maximum(h + b1_ref[...].astype(jnp.float32), 0.0)
    # fc2 on the lane-dense (padded-to-128) N.  LHS kept in f32 for logit
    # precision; the MXU has huge slack here so the f32 path costs nothing.
    out = jnp.dot(h, w2_ref[...].astype(jnp.float32),
                  preferred_element_type=jnp.float32)
    o_ref[...] = (out + b2_ref[...].astype(jnp.float32)).astype(o_ref.dtype)


def prepare_head_params(w1, b1, w2, b2, dtype=jnp.bfloat16):
    """One-time weight prep (hoisted OUT of the per-call path).

    w1: (2H, hid) stored (in, out);  b1: (hid,) or (1, hid)
    w2: (hid, n_classes);            b2: (n_classes,) or (1, n_classes)

    Casts the matmul weights to the storage dtype (bf16 by default -- halves
    HBM traffic), keeps biases in f32, and zero-pads W2/b2 along n_classes to
    a multiple of 128 for unmasked lane-dense stores.
    """
    two_h, hid = w1.shape
    n_classes = w2.shape[-1]
    n_pad = _round_up(n_classes, 128)
    w1p = jnp.asarray(w1, dtype)
    b1p = jnp.asarray(b1, jnp.float32).reshape(1, hid)
    w2p = _pad2(jnp.asarray(w2, dtype), hid, n_pad)
    b2p = _pad2(jnp.asarray(b2, jnp.float32).reshape(1, n_classes), 1, n_pad)
    return w1p, b1p, w2p, b2p


@functools.partial(jax.jit, static_argnames=("n_classes", "out_dtype"))
def concat_classification_head(x1, x2, w1, b1, w2p, b2p, *, n_classes,
                               out_dtype=jnp.float32):
    """ConcatModel tail:  head(cat([x1, x2], -1)).

    x1, x2      : (B, H) pooled encodings (bf16 recommended, f32 accepted)
    w1, b1, w2p, b2p : outputs of prepare_head_params()
    returns     : (B, n_classes) logits in `out_dtype` (f32 by default)
    """
    B, H = x1.shape
    two_h, hid = w1.shape
    assert two_h == 2 * H, "w1 must have 2*H input rows (virtual concat)"
    n_pad = w2p.shape[-1]
    assert n_pad % 128 == 0 and n_classes <= n_pad
    assert b1.shape == (1, hid) and b2p.shape == (1, n_pad)

    block_b = _pick_block_b(B)
    grid = (pl.cdiv(B, block_b),)

    x_item = jnp.dtype(x1.dtype).itemsize
    w_item = jnp.dtype(w1.dtype).itemsize
    o_item = jnp.dtype(out_dtype).itemsize

    cost = pl.CostEstimate(
        flops=2 * B * (2 * H * hid + hid * n_pad),
        transcendentals=0,
        bytes_accessed=(x_item * (x1.size + x2.size)
                        + w_item * (w1.size + w2p.size)
                        + 4 * (b1.size + b2p.size)
                        + o_item * B * n_pad),
    )

    # Explicit VMEM budget from the real footprint (x tiles double-buffered +
    # resident weights + double-buffered output tile), with 2x headroom.
    vmem_bytes = (2 * 2 * block_b * H * x_item       # x1, x2 (2 bufs each)
                  + (2 * H * hid + hid * n_pad) * w_item
                  + (hid + n_pad) * 4                 # f32 biases
                  + 2 * block_b * n_pad * o_item)     # output tile (2 bufs)
    vmem_limit = int(min(max(2 * vmem_bytes, 16 << 20), 64 << 20))

    out_p = pl.pallas_call(
        _concat_head_kernel,
        out_shape=jax.ShapeDtypeStruct((B, n_pad), out_dtype),
        grid_spec=pltpu.PrefetchScalarGridSpec(
            num_scalar_prefetch=0,
            grid=grid,
            in_specs=[
                pl.BlockSpec((block_b, H), lambda i: (i, 0)),     # x1 streamed
                pl.BlockSpec((block_b, H), lambda i: (i, 0)),     # x2 streamed
                pl.BlockSpec((2 * H, hid), lambda i: (0, 0)),     # W1 resident
                pl.BlockSpec((1, hid), lambda i: (0, 0)),         # b1
                pl.BlockSpec((hid, n_pad), lambda i: (0, 0)),     # W2 (lane-dense)
                pl.BlockSpec((1, n_pad), lambda i: (0, 0)),       # b2
            ],
            out_specs=pl.BlockSpec((block_b, n_pad), lambda i: (i, 0)),
        ),
        compiler_params=pltpu.CompilerParams(
            dimension_semantics=("parallel",),
            vmem_limit_bytes=vmem_limit),
        cost_estimate=cost,
    )(x1, x2, w1, b1, w2p, b2p)

    return out_p[:, :n_classes]


def init_params(key, input_size, n_classes, hidden=128, dtype=jnp.float32):
    """Deterministic init mimicking nn.Linear default (uniform +-1/sqrt(fan_in))."""
    k1, k2, k3, k4 = jax.random.split(key, 4)
    bound1 = 1.0 / jnp.sqrt(input_size)
    bound2 = 1.0 / jnp.sqrt(hidden)
    w1 = jax.random.uniform(k1, (input_size, hidden), dtype, -bound1, bound1)
    b1 = jax.random.uniform(k2, (1, hidden), dtype, -bound1, bound1)
    w2 = jax.random.uniform(k3, (hidden, n_classes), dtype, -bound2, bound2)
    b2 = jax.random.uniform(k4, (1, n_classes), dtype, -bound2, bound2)
    return w1, b1, w2, b2


if __name__ == "__main__":
    # TODO(synk): the pretrained BERT / audio encoders (and the unused Dropout
    # modules) of ConcatModel are not translated; the kernel covers
    # torch.cat + ClassificationHead.
    key = jax.random.PRNGKey(0)
    kx1, kx2, kp = jax.random.split(key, 3)

    B, text_hidden, n_classes = 2, 96, 4
    in_f = 2 * text_hidden

    # pooled encoder outputs for the two sequences
    x1 = jax.random.normal(kx1, (B, text_hidden), jnp.float32)
    x2 = jax.random.normal(kx2, (B, text_hidden), jnp.float32)
    w1, b1, w2, b2 = init_params(kp, in_f, n_classes)

    # plain-JAX reference (materialized concat)
    xc = jnp.concatenate([x1, x2], axis=-1)
    ref = jnp.maximum(xc @ w1 + b1, 0.0) @ w2 + b2

    # f32 storage path (exact-ish check)
    p32 = prepare_head_params(w1, b1, w2, b2, dtype=jnp.float32)
    out = concat_classification_head(x1, x2, *p32, n_classes=n_classes)
    out = jax.block_until_ready(out)
    assert out.shape == (B, n_classes)
    assert jnp.allclose(out, ref, atol=5e-3, rtol=5e-3)

    # bf16 storage path (default; halves HBM traffic) -- f32 accumulate/bias/
    # ReLU/fc2-LHS inside the kernel, f32 logits out.
    pbf = prepare_head_params(w1, b1, w2, b2)  # dtype defaults to bf16
    out_bf = concat_classification_head(
        x1.astype(jnp.bfloat16), x2.astype(jnp.bfloat16), *pbf,
        n_classes=n_classes)
    out_bf = jax.block_until_ready(out_bf)
    assert out_bf.dtype == jnp.float32
    assert jnp.allclose(out_bf, ref, atol=5e-2, rtol=5e-2)

    print("KERNEL_OK")
</pallas_src>

<mosaic_0001>
module attributes {stable_mosaic.version = 11 : i64} {
  func.func @_concat_head_kernel(%arg0: i32, %arg1: memref<8x96xf32, #tpu.memory_space<vmem>>, %arg2: memref<8x96xf32, #tpu.memory_space<vmem>>, %arg3: memref<192x128xf32, #tpu.memory_space<vmem>>, %arg4: memref<1x128xf32, #tpu.memory_space<vmem>>, %arg5: memref<128x128xf32, #tpu.memory_space<vmem>>, %arg6: memref<1x128xf32, #tpu.memory_space<vmem>>, %arg7: memref<8x128xf32, #tpu.memory_space<vmem>>) attributes {dimension_semantics = [#tpu.dimension_semantics<parallel>], iteration_bounds = array<i64: 1>, scalar_prefetch = 0 : i64, scratch_operands = 0 : i64, tpu.core_type = #tpu.core_type<tc>, window_params = [{transform_indices = @transform_0, window_bounds = array<i64: 8, 96>}, {transform_indices = @transform_1, window_bounds = array<i64: 8, 96>}, {pipeline_mode = #tpu.pipeline_mode<synchronous>, transform_indices = @transform_2, window_bounds = array<i64: 192, 128>}, {pipeline_mode = #tpu.pipeline_mode<synchronous>, transform_indices = @transform_3, window_bounds = array<i64: 1, 128>}, {pipeline_mode = #tpu.pipeline_mode<synchronous>, transform_indices = @transform_4, window_bounds = array<i64: 128, 128>}, {pipeline_mode = #tpu.pipeline_mode<synchronous>, transform_indices = @transform_5, window_bounds = array<i64: 1, 128>}, {transform_indices = @transform_6, window_bounds = array<i64: 8, 128>}]} {
    %c0 = arith.constant 0 : index
    %c0_0 = arith.constant 0 : index
    %0 = vector.load %arg1[%c0, %c0_0] : memref<8x96xf32, #tpu.memory_space<vmem>>, vector<8x96xf32>
    %c0_1 = arith.constant 0 : index
    %c0_2 = arith.constant 0 : index
    %1 = vector.load %arg3[%c0_1, %c0_2] : memref<192x128xf32, #tpu.memory_space<vmem>>, vector<96x128xf32>
    %cst = arith.constant dense<0.000000e+00> : vector<8x128xf32>
    %2 = tpu.matmul %0, %1, %cst {dimension_numbers = #tpu.dot_dimension_numbers<[1], [0], [0], [1], [0, 0, 1, 1], [], []>} : vector<8x96xf32>, vector<96x128xf32>, vector<8x128xf32> -> vector<8x128xf32>
    %c0_3 = arith.constant 0 : index
    %c0_4 = arith.constant 0 : index
    %3 = vector.load %arg2[%c0_3, %c0_4] : memref<8x96xf32, #tpu.memory_space<vmem>>, vector<8x96xf32>
    %c96 = arith.constant 96 : index
    %c0_5 = arith.constant 0 : index
    %4 = vector.load %arg3[%c96, %c0_5] : memref<192x128xf32, #tpu.memory_space<vmem>>, vector<96x128xf32>
    %cst_6 = arith.constant dense<0.000000e+00> : vector<8x128xf32>
    %5 = tpu.matmul %3, %4, %cst_6 {dimension_numbers = #tpu.dot_dimension_numbers<[1], [0], [0], [1], [0, 0, 1, 1], [], []>} : vector<8x96xf32>, vector<96x128xf32>, vector<8x128xf32> -> vector<8x128xf32>
    %6 = arith.addf %2, %5 : vector<8x128xf32>
    %c0_7 = arith.constant 0 : index
    %c0_8 = arith.constant 0 : index
    %7 = vector.load %arg4[%c0_7, %c0_8] : memref<1x128xf32, #tpu.memory_space<vmem>>, vector<1x128xf32>
    %8 = vector.broadcast %7 : vector<1x128xf32> to vector<8x128xf32>
    %9 = arith.addf %6, %8 : vector<8x128xf32>
    %cst_9 = arith.constant 0.000000e+00 : f32
    %10 = vector.broadcast %cst_9 : f32 to vector<8x128xf32>
    %11 = arith.maximumf %9, %10 : vector<8x128xf32>
    %c0_10 = arith.constant 0 : index
    %c0_11 = arith.constant 0 : index
    %12 = vector.load %arg5[%c0_10, %c0_11] : memref<128x128xf32, #tpu.memory_space<vmem>>, vector<128x128xf32>
    %cst_12 = arith.constant dense<0.000000e+00> : vector<8x128xf32>
    %13 = tpu.matmul %11, %12, %cst_12 {dimension_numbers = #tpu.dot_dimension_numbers<[1], [0], [0], [1], [0, 0, 1, 1], [], []>} : vector<8x128xf32>, vector<128x128xf32>, vector<8x128xf32> -> vector<8x128xf32>
    %c0_13 = arith.constant 0 : index
    %c0_14 = arith.constant 0 : index
    %14 = vector.load %arg6[%c0_13, %c0_14] : memref<1x128xf32, #tpu.memory_space<vmem>>, vector<1x128xf32>
    %15 = vector.broadcast %14 : vector<1x128xf32> to vector<8x128xf32>
    %16 = arith.addf %13, %15 : vector<8x128xf32>
    %c0_15 = arith.constant 0 : index
    %c0_16 = arith.constant 0 : index
    %17 = vector.load %arg7[%c0_15, %c0_16] : memref<8x128xf32, #tpu.memory_space<vmem>>, vector<8x128xf32>
    tpu.vector_store %arg7[%c0_15, %c0_16], %16 {strides = array<i32>} : memref<8x128xf32, #tpu.memory_space<vmem>>, vector<8x128xf32>,
    return
  }
  func.func @transform_0(%arg0: i32) -> (i32, i32) {
    %c0_i32 = arith.constant 0 : i32
    %c0_i32_0 = arith.constant 0 : i32
    return %arg0, %c0_i32 : i32, i32
  }
  func.func @transform_1(%arg0: i32) -> (i32, i32) {
    %c0_i32 = arith.constant 0 : i32
    %c0_i32_0 = arith.constant 0 : i32
    return %arg0, %c0_i32 : i32, i32
  }
  func.func @transform_2(%arg0: i32) -> (i32, i32) {
    %c0_i32 = arith.constant 0 : i32
    %c0_i32_0 = arith.constant 0 : i32
    %c0_i32_1 = arith.constant 0 : i32
    return %c0_i32, %c0_i32_0 : i32, i32
  }
  func.func @transform_3(%arg0: i32) -> (i32, i32) {
    %c0_i32 = arith.constant 0 : i32
    %c0_i32_0 = arith.constant 0 : i32
    %c0_i32_1 = arith.constant 0 : i32
    return %c0_i32, %c0_i32_0 : i32, i32
  }
  func.func @transform_4(%arg0: i32) -> (i32, i32) {
    %c0_i32 = arith.constant 0 : i32
    %c0_i32_0 = arith.constant 0 : i32
    %c0_i32_1 = arith.constant 0 : i32
    return %c0_i32, %c0_i32_0 : i32, i32
  }
  func.func @transform_5(%arg0: i32) -> (i32, i32) {
    %c0_i32 = arith.constant 0 : i32
    %c0_i32_0 = arith.constant 0 : i32
    %c0_i32_1 = arith.constant 0 : i32
    return %c0_i32, %c0_i32_0 : i32, i32
  }
  func.func @transform_6(%arg0: i32) -> (i32, i32) {
    %c0_i32 = arith.constant 0 : i32
    %c0_i32_0 = arith.constant 0 : i32
    return %arg0, %c0_i32 : i32, i32
  }
}

</mosaic_0001>

<llo_original>
// kernel: concat_classification_head.1
$region0: #{concat_classification_head.1}
  #allocation0 [shape = 'u32[]', space=smem, size = 0x4, offset = 0x4, fixed_abs, tag = 'smem constant byte address 0x4 - core index']
  #allocation1 [shape = 'u32[144,128]{1,0:T(1,128)}', space=vmem, size = 0x12000, scoped, tag = 'internal scratch']
  %s0 = inlined_call_operand.hbm [shape: f32[2,96], index: 0, kind: input, shape index: {}]
  %s1 = inlined_call_operand.vmem [shape: f32[2,96], index: 1, kind: input, shape index: {}]
  %s2 = inlined_call_operand.hbm [shape: f32[192,128], index: 2, kind: input, shape index: {}]
  %s3 = inlined_call_operand.vmem [shape: f32[1,128], index: 3, kind: input, shape index: {}]
  %s4 = inlined_call_operand.hbm [shape: f32[128,128], index: 4, kind: input, shape index: {}]
  %s5 = inlined_call_operand.vmem [shape: f32[1,128], index: 5, kind: input, shape index: {}]
  %s6 = inlined_call_operand.hbm [shape: f32[2,128], index: 6, kind: output, shape index: {}]
  %s7 = sld [smem:[#allocation0]]
  $region46: #{concat_classification_head.1} parent=0
    _
  %s9 = ssub.s32 1, %s7
  %s10 = scalar_select 0, %s9, %s7
  $region1: #{concat_classification_head.1} parent=0
    #allocation2 [shape = 'u8[4096]{0}', space=vmem, size = 0x1000, scoped, tag = 'input window, operand 0, single buffered']
    #allocation3 [shape = 's32[1]{0}', space=sflag, size = 0x4, scoped, tag = 'scoped memory for concat_classification_head.1']
    #allocation4 [shape = 's32[1]{0}', space=sflag, size = 0x4, scoped, tag = 'scoped memory for concat_classification_head.1']
    #allocation5 [shape = 'u8[98304]{0}', space=vmem, size = 0x18000, scoped, tag = 'input window, operand 2, single buffered']
    #allocation6 [shape = 's32[1]{0}', space=sflag, size = 0x4, scoped, tag = 'scoped memory for concat_classification_head.1']
    #allocation7 [shape = 'u8[65536]{0}', space=vmem, size = 0x10000, scoped, tag = 'input window, operand 4, single buffered']
    #allocation8 [shape = 'u8[4096]{0}', space=vmem, size = 0x1000, scoped, tag = 'output window, operand 0, single buffered']
    %11 = vsyncpa [#allocation3], 0
    %12 = vsyncpa [#allocation6], 0
    %13 = vsyncpa [#allocation4], 0
    // Predicated region
    $region2: #{concat_classification_head.1} parent=1 // pred_check
      _
    $region3: #{concat_classification_head.1} parent=1 // pred_check_branch
      %15 = sbr.rel (0) target = $region5
    $region4: #{concat_classification_head.1} parent=1 // pred_region
      %s17 = ssub.s32 128, 32
      %18 = vsyncadd [#allocation3], %s17
      %s19 = sshll.u32 [#allocation2], 4
      %s20 = int_to_ptr.vmem [resolvable:$true] %s19
      %25 = dma.hbm_to_vmem [thread:$0]  %s0, 32, %s20, [#allocation3], 32, 32, 2
    $region5: #{concat_classification_head.1} parent=1 // pred_fallthru
      _
    // Predicated region
    $region6: #{concat_classification_head.1} parent=1 // pred_check
      _
    $region7: #{concat_classification_head.1} parent=1 // pred_check_branch
      %27 = sbr.rel (0) target = $region9
    $region8: #{concat_classification_head.1} parent=1 // pred_region
      _
    $region9: #{concat_classification_head.1} parent=1 // pred_fallthru
      _
    // Predicated region
    $region10: #{concat_classification_head.1} parent=1 // pred_check
      _
    $region11: #{concat_classification_head.1} parent=1 // pred_check_branch
      %29 = sbr.rel (0) target = $region13
    $region12: #{concat_classification_head.1} parent=1 // pred_region
      %s31 = ssub.s32 3072, 3072
      %32 = vsyncadd [#allocation6], %s31
      %s33 = sshll.u32 [#allocation5], 4
      %s34 = int_to_ptr.vmem [resolvable:$true] %s33
      %39 = dma.hbm_to_vmem [thread:$0]  %s2, 3072, %s34, [#allocation6], 128, 128, 8
    $region13: #{concat_classification_head.1} parent=1 // pred_fallthru
      _
    // Predicated region
    $region14: #{concat_classification_head.1} parent=1 // pred_check
      _
    $region15: #{concat_classification_head.1} parent=1 // pred_check_branch
      %41 = sbr.rel (0) target = $region17
    $region16: #{concat_classification_head.1} parent=1 // pred_region
      _
    $region17: #{concat_classification_head.1} parent=1 // pred_fallthru
      _
    // Predicated region
    $region18: #{concat_classification_head.1} parent=1 // pred_check
      _
    $region19: #{concat_classification_head.1} parent=1 // pred_check_branch
      %43 = sbr.rel (0) target = $region21
    $region20: #{concat_classification_head.1} parent=1 // pred_region
      %s45 = ssub.s32 2048, 2048
      %46 = vsyncadd [#allocation6], %s45
      %s47 = sshll.u32 [#allocation7], 4
      %s48 = int_to_ptr.vmem [resolvable:$true] %s47
      %53 = dma.hbm_to_vmem [thread:$0]  %s4, 2048, %s48, [#allocation6], 128, 128, 8
    $region21: #{concat_classification_head.1} parent=1 // pred_fallthru
      _
    // Predicated region
    $region22: #{concat_classification_head.1} parent=1 // pred_check
      _
    $region23: #{concat_classification_head.1} parent=1 // pred_check_branch
      %55 = sbr.rel (0) target = $region25
    $region24: #{concat_classification_head.1} parent=1 // pred_region
      _
    $region25: #{concat_classification_head.1} parent=1 // pred_fallthru
      _
    // Predicated region
    $region26: #{concat_classification_head.1} parent=1 // pred_check
      _
    $region27: #{concat_classification_head.1} parent=1 // pred_check_branch
      %57 = sbr.rel (0) target = $region29
    $region28: #{concat_classification_head.1} parent=1 // pred_region
      %58 = dma.done [#allocation3], 128
    $region29: #{concat_classification_head.1} parent=1 // pred_fallthru
      _
    // Predicated region
    $region30: #{concat_classification_head.1} parent=1 // pred_check
      _
    $region31: #{concat_classification_head.1} parent=1 // pred_check_branch
      %60 = sbr.rel (0) target = $region33
    $region32: #{concat_classification_head.1} parent=1 // pred_region
      %61 = dma.done [#allocation6], 3072
    $region33: #{concat_classification_head.1} parent=1 // pred_fallthru
      _
    // Predicated region
    $region34: #{concat_classification_head.1} parent=1 // pred_check
      _
    $region35: #{concat_classification_head.1} parent=1 // pred_check_branch
      %63 = sbr.rel (0) target = $region37
    $region36: #{concat_classification_head.1} parent=1 // pred_region
      %64 = dma.done [#allocation6], 2048
    $region37: #{concat_classification_head.1} parent=1 // pred_fallthru
      _
    %v65 = vld [vmem:[#allocation2] sm:$0xff]
    %v66 = vld [vmem:[#allocation5] sm:$0xff]
    %v67 = vld [vmem:[#allocation5 + $0x8] sm:$0xff]
    %v68 = vld [vmem:[#allocation5 + $0x10] sm:$0xff]
    %v69 = vld [vmem:[#allocation5 + $0x18] sm:$0xff]
    %v70 = vld [vmem:[#allocation5 + $0x20] sm:$0xff]
    %v71 = vld [vmem:[#allocation5 + $0x28] sm:$0xff]
    %v72 = vld [vmem:[#allocation5 + $0x30] sm:$0xff]
    %v73 = vld [vmem:[#allocation5 + $0x38] sm:$0xff]
    %v74 = vld [vmem:[#allocation5 + $0x40] sm:$0xff]
    %v75 = vld [vmem:[#allocation5 + $0x48] sm:$0xff]
    %v76 = vld [vmem:[#allocation5 + $0x50] sm:$0xff]
    %v77 = vld [vmem:[#allocation5 + $0x58] sm:$0xff]
    %v78 = vld [vmem:[%s1] sm:$0xff]
    %v79 = vld [vmem:[#allocation5 + $0x60] sm:$0xff]
    %v80 = vld [vmem:[#allocation5 + $0x68] sm:$0xff]
    %v81 = vld [vmem:[#allocation5 + $0x70] sm:$0xff]
    %v82 = vld [vmem:[#allocation5 + $0x78] sm:$0xff]
    %v83 = vld [vmem:[#allocation5 + $0x80] sm:$0xff]
    %v84 = vld [vmem:[#allocation5 + $0x88] sm:$0xff]
    %v85 = vld [vmem:[#allocation5 + $0x90] sm:$0xff]
    %v86 = vld [vmem:[#allocation5 + $0x98] sm:$0xff]
    %v87 = vld [vmem:[#allocation5 + $0xa0] sm:$0xff]
    %v88 = vld [vmem:[#allocation5 + $0xa8] sm:$0xff]
    %v89 = vld [vmem:[#allocation5 + $0xb0] sm:$0xff]
    %v90 = vld [vmem:[#allocation5 + $0xb8] sm:$0xff]
    %vm91 = vcmask 785408
    %v93 = vsel %vm91, %v78, 0
    %95 = vmatprep.subr.mxu0 0.0
    %96 = vmatpush1.msra.mxu0 %v79
    %97 = vmatprep.subr.mxu0 0.0
    %98 = vmatpush1.msra.mxu0 %v80
    %99 = vmatprep.subr.mxu0 0.0
    %100 = vmatpush1.msra.mxu0 %v81
    %101 = vmatprep.subr.mxu0 0.0
    %102 = vmatpush1.msra.mxu0 %v82
    %103 = vmatprep.subr.mxu0 0.0
    %104 = vmatpush1.msra.mxu0 %v83
    %105 = vmatprep.subr.mxu0 0.0
    %106 = vmatpush1.msra.mxu0 %v84
    %107 = vmatprep.subr.mxu0 0.0
    %108 = vmatpush1.msra.mxu0 %v85
    %109 = vmatprep.subr.mxu0 0.0
    %110 = vmatpush1.msra.mxu0 %v86
    %111 = vmatprep.subr.mxu0 0.0
    %112 = vmatpush1.msra.mxu0 %v87
    %113 = vmatprep.subr.mxu0 0.0
    %114 = vmatpush1.msra.mxu0 %v88
    %115 = vmatprep.subr.mxu0 0.0
    %116 = vmatpush1.msra.mxu0 %v89
    %117 = vmatprep.subr.mxu0 0.0
    %118 = vmatpush1.msra.mxu0 %v90
    %119 = vmatprep.subr.mxu0 0.0
    %120 = vmatpush1.msra.mxu0 0.0
    %121 = vmatprep.subr.mxu0 0.0
    %122 = vmatpush1.msra.mxu0 0.0
    %123 = vmatprep.subr.mxu0 0.0
    %124 = vmatpush1.msra.mxu0 0.0
    %125 = vmatprep.subr.mxu0 0.0
    %126 = vmatpush1.msra.mxu0 0.0
    %127 = vmatprep.subr.mxu0 0.0
    %128 = vmatpush1.msra.mxu0 0.0
    %129 = vmatprep.subr.mxu0 0.0
    %130 = vmatpush1.msra.mxu0 0.0
    %131 = vmatprep.subr.mxu0 0.0
    %132 = vmatpush1.msra.mxu0 0.0
    %133 = vmatprep.subr.mxu0 0.0
    %134 = vmatpush1.msra.mxu0 0.0
    %135 = vmatprep.subr.mxu0 0.0
    %136 = vmatpush1.msra.mxu0 0.0
    %137 = vmatprep.subr.mxu0 0.0
    %138 = vmatpush1.msra.mxu0 0.0
    %139 = vmatprep.subr.mxu0 0.0
    %140 = vmatpush1.msra.mxu0 0.0
    %141 = vmatprep.subr.mxu0 0.0
    %142 = vmatpush1.msra.mxu0 0.0
    %143 = vmatprep.subr.mxu0 0.0
    %144 = vmatpush1.msra.mxu0 0.0
    %145 = vmatprep.subr.mxu0 0.0
    %146 = vmatpush1.msra.mxu0 0.0
    %147 = vmatprep.subr.mxu0 0.0
    %148 = vmatpush1.msra.mxu0 0.0
    %149 = vmatprep.subr.mxu0 0.0
    %150 = vmatpush1.msra.mxu0 0.0
    %151 = vmatprep.subr.mxu0 0.0
    %152 = vmatpush1.msra.mxu0 0.0
    %153 = vmatprep.subr.mxu0 0.0
    %154 = vmatpush1.msra.mxu0 0.0
    %155 = vmatprep.subr.mxu0 0.0
    %156 = vmatpush1.msra.mxu0 0.0
    %157 = vmatprep.subr.mxu0 0.0
    %158 = vmatpush1.msra.mxu0 0.0
    %159 = vmatprep.mubr.f32.mxu0 0.0
    %160 = vmatmul.mubr.f32.gmra.mrb[0].mxu0 %v93
    %v161 = vpop.f32.mrb[0].mxu0
    %v162 = vadd.f32 0.0, %v161
    %v163 = vpop.f32.mrb[0].mxu0
    %164 = vdwg.mxu0
    %v166 = vsel %vm91, %v65, 0
    %168 = vmatprep.subr.mxu0 0.0
    %169 = vmatpush1.msra.mxu0 %v66
    %170 = vmatprep.subr.mxu0 0.0
    %171 = vmatpush1.msra.mxu0 %v67
    %172 = vmatprep.subr.mxu0 0.0
    %173 = vmatpush1.msra.mxu0 %v68
    %174 = vmatprep.subr.mxu0 0.0
    %175 = vmatpush1.msra.mxu0 %v69
    %176 = vmatprep.subr.mxu0 0.0
    %177 = vmatpush1.msra.mxu0 %v70
    %178 = vmatprep.subr.mxu0 0.0
    %179 = vmatpush1.msra.mxu0 %v71
    %180 = vmatprep.subr.mxu0 0.0
    %181 = vmatpush1.msra.mxu0 %v72
    %182 = vmatprep.subr.mxu0 0.0
    %183 = vmatpush1.msra.mxu0 %v73
    %184 = vmatprep.subr.mxu0 0.0
    %185 = vmatpush1.msra.mxu0 %v74
    %186 = vmatprep.subr.mxu0 0.0
    %187 = vmatpush1.msra.mxu0 %v75
    %188 = vmatprep.subr.mxu0 0.0
    %189 = vmatpush1.msra.mxu0 %v76
    %190 = vmatprep.subr.mxu0 0.0
    %191 = vmatpush1.msra.mxu0 %v77
    %192 = vmatprep.subr.mxu0 0.0
    %193 = vmatpush1.msra.mxu0 0.0
    %194 = vmatprep.subr.mxu0 0.0
    %195 = vmatpush1.msra.mxu0 0.0
    %196 = vmatprep.subr.mxu0 0.0
    %197 = vmatpush1.msra.mxu0 0.0
    %198 = vmatprep.subr.mxu0 0.0
    %199 = vmatpush1.msra.mxu0 0.0
    %200 = vmatprep.subr.mxu0 0.0
    %201 = vmatpush1.msra.mxu0 0.0
    %202 = vmatprep.subr.mxu0 0.0
    %203 = vmatpush1.msra.mxu0 0.0
    %204 = vmatprep.subr.mxu0 0.0
    %205 = vmatpush1.msra.mxu0 0.0
    %206 = vmatprep.subr.mxu0 0.0
    %207 = vmatpush1.msra.mxu0 0.0
    %208 = vmatprep.subr.mxu0 0.0
    %209 = vmatpush1.msra.mxu0 0.0
    %210 = vmatprep.subr.mxu0 0.0
    %211 = vmatpush1.msra.mxu0 0.0
    %212 = vmatprep.subr.mxu0 0.0
    %213 = vmatpush1.msra.mxu0 0.0
    %214 = vmatprep.subr.mxu0 0.0
    %215 = vmatpush1.msra.mxu0 0.0
    %216 = vmatprep.subr.mxu0 0.0
    %217 = vmatpush1.msra.mxu0 0.0
    %218 = vmatprep.subr.mxu0 0.0
    %219 = vmatpush1.msra.mxu0 0.0
    %220 = vmatprep.subr.mxu0 0.0
    %221 = vmatpush1.msra.mxu0 0.0
    %222 = vmatprep.subr.mxu0 0.0
    %223 = vmatpush1.msra.mxu0 0.0
    %224 = vmatprep.subr.mxu0 0.0
    %225 = vmatpush1.msra.mxu0 0.0
    %226 = vmatprep.subr.mxu0 0.0
    %227 = vmatpush1.msra.mxu0 0.0
    %228 = vmatprep.subr.mxu0 0.0
    %229 = vmatpush1.msra.mxu0 0.0
    %230 = vmatprep.subr.mxu0 0.0
    %231 = vmatpush1.msra.mxu0 0.0
    %232 = vmatprep.mubr.f32.mxu0 0.0
    %233 = vmatmul.mubr.f32.gmra.mrb[0].mxu0 %v166
    %v234 = vpop.f32.mrb[0].mxu0
    %v235 = vadd.f32 %v162, %v234
    %v236 = vpop.f32.mrb[0].mxu0
    %237 = vdwg.mxu0
    %v238 = vld [vmem:[%s3] sm:$0x1]
    %v240 = vlaneseq
    %v241 = vshrl.u32 %v240, 7
    %v242 = vsub.s32 0, %v241
    %v243 = vrot.slane %v238, %v242
    %v245 = vadd.f32 %v235, %v243
    %v246 = vmax.f32 %v245, 0.0
    %v247 = vld [vmem:[#allocation7] sm:$0xff]
    %v248 = vld [vmem:[#allocation7 + $0x8] sm:$0xff]
    %v249 = vld [vmem:[#allocation7 + $0x10] sm:$0xff]
    %v250 = vld [vmem:[#allocation7 + $0x18] sm:$0xff]
    %v251 = vld [vmem:[#allocation7 + $0x20] sm:$0xff]
    %v252 = vld [vmem:[#allocation7 + $0x28] sm:$0xff]
    %v253 = vld [vmem:[#allocation7 + $0x30] sm:$0xff]
    %v254 = vld [vmem:[#allocation7 + $0x38] sm:$0xff]
    %v255 = vld [vmem:[#allocation7 + $0x40] sm:$0xff]
    %v256 = vld [vmem:[#allocation7 + $0x48] sm:$0xff]
    %v257 = vld [vmem:[#allocation7 + $0x50] sm:$0xff]
    %v258 = vld [vmem:[#allocation7 + $0x58] sm:$0xff]
    %v259 = vld [vmem:[#allocation7 + $0x60] sm:$0xff]
    %v260 = vld [vmem:[#allocation7 + $0x68] sm:$0xff]
    %v261 = vld [vmem:[#allocation7 + $0x70] sm:$0xff]
    %v262 = vld [vmem:[#allocation7 + $0x78] sm:$0xff]
    %v263 = vld [vmem:[%s5] sm:$0x1]
    %v265 = vlaneseq
    %v266 = vshrl.u32 %v265, 7
    %v267 = vsub.s32 0, %v266
    %v268 = vrot.slane %v263, %v267
    %270 = vmatprep.subr.mxu0 0.0
    %271 = vmatpush1.msra.mxu0 %v247
    %272 = vmatprep.subr.mxu0 0.0
    %273 = vmatpush1.msra.mxu0 %v248
    %274 = vmatprep.subr.mxu0 0.0
    %275 = vmatpush1.msra.mxu0 %v249
    %276 = vmatprep.subr.mxu0 0.0
    %277 = vmatpush1.msra.mxu0 %v250
    %278 = vmatprep.subr.mxu0 0.0
    %279 = vmatpush1.msra.mxu0 %v251
    %280 = vmatprep.subr.mxu0 0.0
    %281 = vmatpush1.msra.mxu0 %v252
    %282 = vmatprep.subr.mxu0 0.0
    %283 = vmatpush1.msra.mxu0 %v253
    %284 = vmatprep.subr.mxu0 0.0
    %285 = vmatpush1.msra.mxu0 %v254
    %286 = vmatprep.subr.mxu0 0.0
    %287 = vmatpush1.msra.mxu0 %v255
    %288 = vmatprep.subr.mxu0 0.0
    %289 = vmatpush1.msra.mxu0 %v256
    %290 = vmatprep.subr.mxu0 0.0
    %291 = vmatpush1.msra.mxu0 %v257
    %292 = vmatprep.subr.mxu0 0.0
    %293 = vmatpush1.msra.mxu0 %v258
    %294 = vmatprep.subr.mxu0 0.0
    %295 = vmatpush1.msra.mxu0 %v259
    %296 = vmatprep.subr.mxu0 0.0
    %297 = vmatpush1.msra.mxu0 %v260
    %298 = vmatprep.subr.mxu0 0.0
    %299 = vmatpush1.msra.mxu0 %v261
    %300 = vmatprep.subr.mxu0 0.0
    %301 = vmatpush1.msra.mxu0 %v262
    %302 = vmatprep.subr.mxu0 0.0
    %303 = vmatpush1.msra.mxu0 0.0
    %304 = vmatprep.subr.mxu0 0.0
    %305 = vmatpush1.msra.mxu0 0.0
    %306 = vmatprep.subr.mxu0 0.0
    %307 = vmatpush1.msra.mxu0 0.0
    %308 = vmatprep.subr.mxu0 0.0
    %309 = vmatpush1.msra.mxu0 0.0
    %310 = vmatprep.subr.mxu0 0.0
    %311 = vmatpush1.msra.mxu0 0.0
    %312 = vmatprep.subr.mxu0 0.0
    %313 = vmatpush1.msra.mxu0 0.0
    %314 = vmatprep.subr.mxu0 0.0
    %315 = vmatpush1.msra.mxu0 0.0
    %316 = vmatprep.subr.mxu0 0.0
    %317 = vmatpush1.msra.mxu0 0.0
    %318 = vmatprep.subr.mxu0 0.0
    %319 = vmatpush1.msra.mxu0 0.0
    %320 = vmatprep.subr.mxu0 0.0
    %321 = vmatpush1.msra.mxu0 0.0
    %322 = vmatprep.subr.mxu0 0.0
    %323 = vmatpush1.msra.mxu0 0.0
    %324 = vmatprep.subr.mxu0 0.0
    %325 = vmatpush1.msra.mxu0 0.0
    %326 = vmatprep.subr.mxu0 0.0
    %327 = vmatpush1.msra.mxu0 0.0
    %328 = vmatprep.subr.mxu0 0.0
    %329 = vmatpush1.msra.mxu0 0.0
    %330 = vmatprep.subr.mxu0 0.0
    %331 = vmatpush1.msra.mxu0 0.0
    %332 = vmatprep.subr.mxu0 0.0
    %333 = vmatpush1.msra.mxu0 0.0
    %334 = vmatprep.mubr.f32.mxu0 0.0
    %335 = vmatmul.mubr.f32.gmra.mrb[0].mxu0 %v246
    %v336 = vpop.f32.mrb[0].mxu0
    %v337 = vadd.f32 %v268, %v336
    %v338 = vpop.f32.mrb[0].mxu0
    %339 = vdwg.mxu0
    %340 = vst [vmem:[#allocation8] sm:$0xff] %v337
    // Predicated region
    $region38: #{concat_classification_head.1} parent=1 // pred_check
      _
    $region39: #{concat_classification_head.1} parent=1 // pred_check_branch
      %342 = sbr.rel (0) target = $region41
    $region40: #{concat_classification_head.1} parent=1 // pred_region
      %s344 = ssub.s32 128, 32
      %345 = vsyncadd [#allocation4], %s344
      %s346 = sshll.u32 [#allocation8], 4
      %s347 = int_to_ptr.vmem [resolvable:$true] %s346
      %352 = dma.vmem_to_hbm [thread:$0]  %s347, 32, %s6, [#allocation4], 32, 32, 2
    $region41: #{concat_classification_head.1} parent=1 // pred_fallthru
      _
    // Predicated region
    $region42: #{concat_classification_head.1} parent=1 // pred_check
      _
    $region43: #{concat_classification_head.1} parent=1 // pred_check_branch
      %354 = sbr.rel (0) target = $region45
    $region44: #{concat_classification_head.1} parent=1 // pred_region
      %355 = dma.done [#allocation4], 128
    $region45: #{concat_classification_head.1} parent=1 // pred_fallthru
      _
    %356 = vsyncpa [#allocation3], 1
    %357 = vsyncpa [#allocation6], 1
    %358 = vsyncpa [#allocation4], 1

</llo_original>
